<compile_context>
chip_gen: v5e
topology: v5e:2x2
jax: 0.10.0
libtpu: 0.0.40
codegen_flags: <defaults>
</compile_context>

<pallas_src>
import math

import jax
import jax.numpy as jnp
from jax.experimental import pallas as pl
from jax.experimental.pallas import tpu as pltpu


def _concat_kernel(*refs):
    """refs = (*input_refs, out_ref): copy each input tile into its column slot."""
    out_ref = refs[-1]
    col = 0
    for in_ref in refs[:-1]:
        w = in_ref.shape[-1]
        out_ref[:, col:col + w] = in_ref[...]   # static slice -> plain vst
        col += w


def concat(xs, dim=1):
    """Forward of Concat: xs is a tuple/list of arrays; returns concat along `dim`."""
    xs = [jnp.asarray(x) for x in xs]
    assert len(xs) >= 1
    ndim = xs[0].ndim
    dim = dim % ndim
    lead_shape = xs[0].shape[:dim]
    trail_shape = xs[0].shape[dim + 1:]
    for x in xs:
        assert x.ndim == ndim
        assert x.shape[:dim] == lead_shape and x.shape[dim + 1:] == trail_shape

    # torch.cat promotes to a common dtype; do the same (no-op when equal).
    dtype = jnp.result_type(*[x.dtype for x in xs])
    xs = [x if x.dtype == dtype else x.astype(dtype) for x in xs]

    if len(xs) == 1:
        return xs[0]

    out_full_shape = lead_shape + (sum(x.shape[dim] for x in xs),) + trail_shape

    # Flatten each input to a lane-dense 2D slab (rows, width_i).  Row-major
    # reshape => column-concat of these slabs == torch.cat along `dim`.
    rows = math.prod(lead_shape) if lead_shape else 1
    widths = [math.prod(x.shape[dim:]) for x in xs]
    w_total = sum(widths)
    flats = [x.reshape(rows, w) for x, w in zip(xs, widths)]

    # Row-tile sizing: double-buffered working set per row is
    # 2 * (sum(inputs) + output) = 4 * w_total * itemsize bytes.  Target a
    # ~12 MiB working set under an explicit 32 MiB scoped-VMEM limit (safe on
    # every generation, incl. v7x's 64 MiB VMEM), which keeps per-step overhead
    # amortized and sits near the measured HBM roofline plateau.
    itemsize = jnp.dtype(dtype).itemsize
    budget_bytes = 12 * 1024 * 1024
    rows_fit = max(1, budget_bytes // (4 * w_total * itemsize))
    # Sublane granularity: 8 rows for 32-bit, scaled for packed dtypes
    # (16 for bf16, 32 for int8/fp8) so tiles stay layout-aligned.
    sub = 8 * max(1, 4 // itemsize)
    if rows_fit >= rows:
        tile_rows = rows                                  # single block along rows
    else:
        tile_rows = max(sub, (rows_fit // sub) * sub)
        tile_rows = min(tile_rows, rows)

    grid = (pl.cdiv(rows, tile_rows),)
    in_specs = [pl.BlockSpec((tile_rows, w), lambda i: (i, 0)) for w in widths]
    out_spec = pl.BlockSpec((tile_rows, w_total), lambda i: (i, 0))

    out2d = pl.pallas_call(
        _concat_kernel,
        out_shape=jax.ShapeDtypeStruct((rows, w_total), dtype),
        grid=grid,
        in_specs=in_specs,
        out_specs=out_spec,
        compiler_params=pltpu.CompilerParams(
            # Row tiles are independent -> shard the loop across both
            # TensorCores on v7x; harmless elsewhere.
            dimension_semantics=("parallel",),
            vmem_limit_bytes=32 * 1024 * 1024,
        ),
    )(*flats)

    return out2d.reshape(out_full_shape)


if __name__ == "__main__":
    key = jax.random.PRNGKey(0)
    k1, k2, k3, k4, k5 = jax.random.split(key, 5)

    # Case 1: default Concat(dim=1) on NCHW inputs (matches the module default).
    a = jax.random.normal(k1, (2, 4, 16, 16), dtype=jnp.float32)
    b = jax.random.normal(k2, (2, 4, 16, 16), dtype=jnp.float32)
    out = concat((a, b), dim=1)
    jax.block_until_ready(out)
    ref = jnp.concatenate([a, b], axis=1)
    assert out.shape == ref.shape and out.dtype == ref.dtype
    assert jnp.array_equal(out, ref)

    # Case 2: three inputs with uneven channel counts (still dim=1).
    c = jax.random.normal(k3, (2, 3, 16, 16), dtype=jnp.float32)
    d = jax.random.normal(k4, (2, 5, 16, 16), dtype=jnp.float32)
    e = jax.random.normal(k5, (2, 8, 16, 16), dtype=jnp.float32)
    out2 = concat((c, d, e), dim=1)
    jax.block_until_ready(out2)
    ref2 = jnp.concatenate([c, d, e], axis=1)
    assert out2.shape == ref2.shape and jnp.array_equal(out2, ref2)

    # Case 3: bf16 inputs, concat along the last dim.
    f = jax.random.normal(k1, (2, 8, 32), dtype=jnp.bfloat16)
    g = jax.random.normal(k2, (2, 8, 32), dtype=jnp.bfloat16)
    out3 = concat((f, g), dim=2)
    jax.block_until_ready(out3)
    ref3 = jnp.concatenate([f, g], axis=2)
    assert out3.shape == ref3.shape and out3.dtype == ref3.dtype
    assert jnp.array_equal(out3, ref3)

    print("KERNEL_OK")
</pallas_src>

<mosaic_0001>
module attributes {stable_mosaic.version = 11 : i64} {
  func.func @_concat_kernel(%arg0: i32, %arg1: memref<2x1024xf32, #tpu.memory_space<vmem>>, %arg2: memref<2x1024xf32, #tpu.memory_space<vmem>>, %arg3: memref<2x2048xf32, #tpu.memory_space<vmem>>) attributes {dimension_semantics = [#tpu.dimension_semantics<parallel>], iteration_bounds = array<i64: 1>, scalar_prefetch = 0 : i64, scratch_operands = 0 : i64, tpu.core_type = #tpu.core_type<tc>, window_params = [{transform_indices = @transform_0, window_bounds = array<i64: 2, 1024>}, {transform_indices = @transform_1, window_bounds = array<i64: 2, 1024>}, {transform_indices = @transform_2, window_bounds = array<i64: 2, 2048>}]} {
    %c0 = arith.constant 0 : index
    %c0_0 = arith.constant 0 : index
    %0 = vector.load %arg1[%c0, %c0_0] : memref<2x1024xf32, #tpu.memory_space<vmem>>, vector<2x1024xf32>
    %c0_1 = arith.constant 0 : index
    %c0_2 = arith.constant 0 : index
    %1 = vector.load %arg3[%c0_1, %c0_2] : memref<2x2048xf32, #tpu.memory_space<vmem>>, vector<2x1024xf32>
    tpu.vector_store %arg3[%c0_1, %c0_2], %0 {strides = array<i32>} : memref<2x2048xf32, #tpu.memory_space<vmem>>, vector<2x1024xf32>,
    %c0_3 = arith.constant 0 : index
    %c0_4 = arith.constant 0 : index
    %2 = vector.load %arg2[%c0_3, %c0_4] : memref<2x1024xf32, #tpu.memory_space<vmem>>, vector<2x1024xf32>
    %c0_5 = arith.constant 0 : index
    %c1024 = arith.constant 1024 : index
    %3 = vector.load %arg3[%c0_5, %c1024] : memref<2x2048xf32, #tpu.memory_space<vmem>>, vector<2x1024xf32>
    tpu.vector_store %arg3[%c0_5, %c1024], %2 {strides = array<i32>} : memref<2x2048xf32, #tpu.memory_space<vmem>>, vector<2x1024xf32>,
    return
  }
  func.func @transform_0(%arg0: i32) -> (i32, i32) {
    %c0_i32 = arith.constant 0 : i32
    %c0_i32_0 = arith.constant 0 : i32
    return %arg0, %c0_i32 : i32, i32
  }
  func.func @transform_1(%arg0: i32) -> (i32, i32) {
    %c0_i32 = arith.constant 0 : i32
    %c0_i32_0 = arith.constant 0 : i32
    return %arg0, %c0_i32 : i32, i32
  }
  func.func @transform_2(%arg0: i32) -> (i32, i32) {
    %c0_i32 = arith.constant 0 : i32
    %c0_i32_0 = arith.constant 0 : i32
    return %arg0, %c0_i32 : i32, i32
  }
}

</mosaic_0001>

<llo_original>
// kernel: tpu_custom_call.1
$region0: #{tpu_custom_call.1}
  #allocation0 [shape = 'u32[]', space=smem, size = 0x4, offset = 0x4, fixed_abs, tag = 'smem constant byte address 0x4 - core index']
  #allocation1 [shape = 'u32[72,128]{1,0:T(1,128)}', space=vmem, size = 0x9000, scoped, tag = 'internal scratch']
  %s0 = inlined_call_operand.hbm [shape: f32[2,1024], index: 0, kind: input, shape index: {}]
  %s1 = inlined_call_operand.hbm [shape: f32[2,1024], index: 1, kind: input, shape index: {}]
  %s2 = inlined_call_operand.hbm [shape: f32[2,2048], index: 2, kind: output, shape index: {}]
  %s3 = sld [smem:[#allocation0]]
  $region26: #{tpu_custom_call.1} parent=0
    _
  %s5 = ssub.s32 1, %s3
  %s6 = scalar_select 0, %s5, %s3
  $region1: #{tpu_custom_call.1} parent=0
    #allocation2 [shape = 'u8[8192]{0}', space=vmem, size = 0x2000, scoped, tag = 'input window, operand 0, single buffered']
    #allocation3 [shape = 's32[1]{0}', space=sflag, size = 0x4, scoped, tag = 'scoped memory for tpu_custom_call.1']
    #allocation4 [shape = 's32[1]{0}', space=sflag, size = 0x4, scoped, tag = 'scoped memory for tpu_custom_call.1']
    #allocation5 [shape = 'u8[8192]{0}', space=vmem, size = 0x2000, scoped, tag = 'input window, operand 1, single buffered']
    #allocation6 [shape = 's32[1]{0}', space=sflag, size = 0x4, scoped, tag = 'scoped memory for tpu_custom_call.1']
    #allocation7 [shape = 'u8[16384]{0}', space=vmem, size = 0x4000, scoped, tag = 'output window, operand 0, single buffered']
    %7 = vsyncpa [#allocation3], 0
    %8 = vsyncpa [#allocation6], 0
    %9 = vsyncpa [#allocation4], 0
    // Predicated region
    $region2: #{tpu_custom_call.1} parent=1 // pred_check
      _
    $region3: #{tpu_custom_call.1} parent=1 // pred_check_branch
      %11 = sbr.rel (0) target = $region5
    $region4: #{tpu_custom_call.1} parent=1 // pred_region
      %13 = vsyncadd [#allocation3], 0
      %s15 = sshll.u32 %s0, 4
      %s16 = int_to_ptr.hbm [resolvable:$true] %s15
      %s17 = sshll.u32 [#allocation2], 4
      %s18 = int_to_ptr.vmem [resolvable:$true] %s17
      %20 = dma.hbm_to_vmem [thread:$0]  %s16, 256, %s18, [#allocation3]
    $region5: #{tpu_custom_call.1} parent=1 // pred_fallthru
      _
    // Predicated region
    $region6: #{tpu_custom_call.1} parent=1 // pred_check
      _
    $region7: #{tpu_custom_call.1} parent=1 // pred_check_branch
      %22 = sbr.rel (0) target = $region9
    $region8: #{tpu_custom_call.1} parent=1 // pred_region
      %24 = vsyncadd [#allocation6], 0
      %s26 = sshll.u32 %s1, 4
      %s27 = int_to_ptr.hbm [resolvable:$true] %s26
      %s28 = sshll.u32 [#allocation5], 4
      %s29 = int_to_ptr.vmem [resolvable:$true] %s28
      %31 = dma.hbm_to_vmem [thread:$0]  %s27, 256, %s29, [#allocation6]
    $region9: #{tpu_custom_call.1} parent=1 // pred_fallthru
      _
    // Predicated region
    $region10: #{tpu_custom_call.1} parent=1 // pred_check
      _
    $region11: #{tpu_custom_call.1} parent=1 // pred_check_branch
      %33 = sbr.rel (0) target = $region13
    $region12: #{tpu_custom_call.1} parent=1 // pred_region
      %35 = dma.done [#allocation3], 256
    $region13: #{tpu_custom_call.1} parent=1 // pred_fallthru
      _
    // Predicated region
    $region14: #{tpu_custom_call.1} parent=1 // pred_check
      _
    $region15: #{tpu_custom_call.1} parent=1 // pred_check_branch
      %37 = sbr.rel (0) target = $region17
    $region16: #{tpu_custom_call.1} parent=1 // pred_region
      %39 = dma.done [#allocation6], 256
    $region17: #{tpu_custom_call.1} parent=1 // pred_fallthru
      _
    %v40 = vld [vmem:[#allocation2] sm:$0xff]
    %v41 = vld [vmem:[#allocation2 + $0x8] sm:$0xff]
    %42 = vst [vmem:[#allocation7] sm:$0xff] %v40
    %43 = vst [vmem:[#allocation7 + $0x8] sm:$0xff] %v41
    %v44 = vld [vmem:[#allocation5] sm:$0xff]
    %v45 = vld [vmem:[#allocation5 + $0x8] sm:$0xff]
    %46 = vst [vmem:[#allocation7 + $0x10] sm:$0xff] %v44
    %47 = vst [vmem:[#allocation7 + $0x18] sm:$0xff] %v45
    // Predicated region
    $region18: #{tpu_custom_call.1} parent=1 // pred_check
      _
    $region19: #{tpu_custom_call.1} parent=1 // pred_check_branch
      %49 = sbr.rel (0) target = $region21
    $region20: #{tpu_custom_call.1} parent=1 // pred_region
      %51 = vsyncadd [#allocation4], 0
      %s53 = sshll.u32 [#allocation7], 4
      %s54 = int_to_ptr.vmem [resolvable:$true] %s53
      %s55 = sshll.u32 %s2, 4
      %s56 = int_to_ptr.hbm [resolvable:$true] %s55
      %58 = dma.vmem_to_hbm [thread:$0]  %s54, 512, %s56, [#allocation4]
    $region21: #{tpu_custom_call.1} parent=1 // pred_fallthru
      _
    // Predicated region
    $region22: #{tpu_custom_call.1} parent=1 // pred_check
      _
    $region23: #{tpu_custom_call.1} parent=1 // pred_check_branch
      %60 = sbr.rel (0) target = $region25
    $region24: #{tpu_custom_call.1} parent=1 // pred_region
      %62 = dma.done [#allocation4], 512
    $region25: #{tpu_custom_call.1} parent=1 // pred_fallthru
      _
    %63 = vsyncpa [#allocation3], 1
    %64 = vsyncpa [#allocation6], 1
    %65 = vsyncpa [#allocation4], 1

</llo_original>
